<compile_context>
chip_gen: v6e
topology: v6e:2x2x1
jax: 0.10.0
libtpu: 0.0.40
codegen_flags: <defaults>
</compile_context>

<pallas_src>
import jax
import jax.numpy as jnp
from jax.experimental import pallas as pl
from jax.experimental.pallas import tpu as pltpu


def _add_prompt_kernel(x_ref, p_ref, o_ref):
    # x_ref: (Bt, T, F) or (Bt, T*F) block at native dtype;
    # p_ref: (T, F) or (1, T*F) shared prompt in the promoted dtype.
    # In-kernel cast reproduces PyTorch type promotion without an extra HBM
    # round trip in the wrapper.
    o_ref[...] = x_ref[...].astype(o_ref.dtype) + p_ref[...]


def _tpu_block_config():
    """Per-generation (target block bytes, vmem_limit_bytes or None, n_tensorcores)."""
    try:
        kind = jax.devices()[0].device_kind.lower()
    except Exception:
        kind = ""
    if "v7" in kind:
        # v7x: 64 MiB VMEM/TC, 3.2 TB/s HBM, 2 TCs/chip. Bigger blocks amortize
        # the ~0.35us/step overhead; 4x(~6 MiB) needs the scoped limit raised.
        return 6 << 20, 48 << 20, 2
    if "v6" in kind:
        # v6e: 32 MiB scoped default; 4x4 MiB fits comfortably.
        return 4 << 20, None, 1
    if "v5" in kind or "lite" in kind:
        # v5e: scoped default is 16 MiB; keep ~4x block <= ~12 MiB.
        return 3 << 20, None, 1
    # Unknown backend: conservative.
    return 2 << 20, None, 1


def _choose_batch_tile(B, per_batch_bytes, target_bytes, n_cores):
    """Batch rows per block: ~target-sized blocks; on multi-TC chips keep >=2
    grid steps (when B >= 2) so both TensorCores stream HBM."""
    bt = max(1, int(target_bytes // max(1, per_batch_bytes)))
    bt = min(bt, B)
    if n_cores >= 2 and B >= 2:
        bt = min(bt, pl.cdiv(B, 2))
    return max(1, bt)


def input_prompt_forward(x, pad_up, pad_down, pad_left, pad_right,
                         prompt_size, input_tdim, input_fdim,
                         donate_x=False, block_target_bytes=None):
    """JAX/Pallas equivalent of Input_prompt.forward.

    x:         (B, input_tdim, input_fdim)   -- any float dtype
    pad_up:    (1, prompt_size, input_fdim)
    pad_down:  (1, prompt_size, input_fdim)
    pad_left:  (1, input_tdim - 2*prompt_size, prompt_size)
    pad_right: (1, input_tdim - 2*prompt_size, prompt_size)
    """
    B, T, F = x.shape
    assert (T, F) == (input_tdim, input_fdim)
    base_tsize = input_tdim - 2 * prompt_size
    base_fsize = input_fdim - 2 * prompt_size

    # PyTorch type-promotion contract (e.g. bf16 x + f32 pads -> f32 out).
    out_dtype = jnp.result_type(x.dtype, pad_up.dtype)

    # --- parameter glue (mirrors the torch.cat calls exactly) ---
    base = jnp.zeros((1, base_tsize, base_fsize), dtype=pad_up.dtype)
    mid = jnp.concatenate([pad_left, base, pad_right], axis=2)   # (1, T-2P, F)
    prompt = jnp.concatenate([pad_up, mid, pad_down], axis=1)    # (1, T, F)
    prompt2d = prompt[0].astype(out_dtype)                       # (T, F), tiny

    x_item = jnp.dtype(x.dtype).itemsize
    out_item = jnp.dtype(out_dtype).itemsize

    target, vmem_limit, n_cores = _tpu_block_config()
    if block_target_bytes is not None:
        target = block_target_bytes

    per_batch = T * F * max(x_item, out_item)
    bt = _choose_batch_tile(B, per_batch, target, n_cores)

    # When T isn't sublane-aligned, flatten to (B, T*F): one large lane-dense
    # slab per block (unmasked full-vreg loads/stores), free row-major reshape.
    flatten = (T % 8 != 0)
    if flatten:
        if bt < B:
            bt = max(8, (bt // 8) * 8)   # sublane-dim of a partial block must be %8
        if bt >= B:
            bt = B                       # block == full dim also satisfies the rule

    grid = (pl.cdiv(B, bt),)  # trailing block may be partial: padded reads feed
                              # masked writes only (pure elementwise add).

    if flatten:
        x_in = x.reshape(B, T * F)
        p_in = prompt2d.reshape(1, T * F)
        in_specs = [
            pl.BlockSpec((bt, T * F), lambda b: (b, 0)),
            pl.BlockSpec((1, T * F), lambda b: (0, 0)),    # constant -> DMA skipped
        ]
        out_specs = pl.BlockSpec((bt, T * F), lambda b: (b, 0))
        out_shape = jax.ShapeDtypeStruct((B, T * F), out_dtype)
    else:
        x_in = x
        p_in = prompt2d
        in_specs = [
            pl.BlockSpec((bt, T, F), lambda b: (b, 0, 0)),
            pl.BlockSpec((T, F), lambda b: (0, 0)),        # constant -> DMA skipped
        ]
        out_specs = pl.BlockSpec((bt, T, F), lambda b: (b, 0, 0))
        out_shape = jax.ShapeDtypeStruct((B, T, F), out_dtype)

    cost = pl.CostEstimate(
        flops=B * T * F,
        transcendentals=0,
        bytes_accessed=(B * T * F * x_item          # read x at native dtype
                        + B * T * F * out_item      # write promoted output
                        + T * F * out_item),        # prompt, once
    )

    cp_kwargs = {"dimension_semantics": ("parallel",)}
    if vmem_limit is not None:
        cp_kwargs["vmem_limit_bytes"] = vmem_limit
    compiler_params = pltpu.CompilerParams(**cp_kwargs)

    call_kwargs = {}
    if donate_x and x.dtype == out_dtype:
        # Add in place over x's HBM buffer (only if caller no longer needs x).
        call_kwargs["input_output_aliases"] = {0: 0}

    out = pl.pallas_call(
        _add_prompt_kernel,
        out_shape=out_shape,
        grid=grid,
        in_specs=in_specs,
        out_specs=out_specs,
        compiler_params=compiler_params,
        cost_estimate=cost,
        **call_kwargs,
    )(x_in, p_in)

    if flatten:
        out = out.reshape(B, T, F)
    return out


def _reference(x, pad_up, pad_down, pad_left, pad_right, prompt_size, T, F):
    base = jnp.zeros((1, T - 2 * prompt_size, F - 2 * prompt_size), pad_up.dtype)
    mid = jnp.concatenate([pad_left, base, pad_right], axis=2)
    prompt_ref = jnp.concatenate([pad_up, mid, pad_down], axis=1)
    return x + prompt_ref  # broadcast over batch, numpy-style promotion


def _make_params(key, prompt_size, T, F, dtype=jnp.float32):
    k_up, k_down, k_left, k_right = jax.random.split(key, 4)
    pad_up = jax.random.normal(k_up, (1, prompt_size, F), dtype=dtype)
    pad_down = jax.random.normal(k_down, (1, prompt_size, F), dtype=dtype)
    pad_left = jax.random.normal(
        k_left, (1, T - 2 * prompt_size, prompt_size), dtype=dtype)
    pad_right = jax.random.normal(
        k_right, (1, T - 2 * prompt_size, prompt_size), dtype=dtype)
    return pad_up, pad_down, pad_left, pad_right


if __name__ == "__main__":
    key = jax.random.PRNGKey(0)
    k0, k1, k2, k3, k4 = jax.random.split(key, 5)

    ok = True

    # --- Test 1: main case (B=2, T=16, F=128, f32) ---
    B, P, T, F = 2, 4, 16, 128
    x = jax.random.normal(k0, (B, T, F), dtype=jnp.float32)
    pads = _make_params(k1, P, T, F)
    out = jax.block_until_ready(input_prompt_forward(x, *pads, P, T, F))
    exp = _reference(x, *pads, P, T, F)
    ok &= out.shape == exp.shape and out.dtype == exp.dtype
    ok &= bool(jnp.allclose(out, exp, atol=1e-6))

    # --- Test 2: mixed precision (bf16 x, f32 pads) -> in-kernel promotion ---
    x_bf = jax.random.normal(k2, (B, T, F), dtype=jnp.bfloat16)
    out = jax.block_until_ready(input_prompt_forward(x_bf, *pads, P, T, F))
    exp = _reference(x_bf, *pads, P, T, F)
    ok &= out.dtype == exp.dtype
    ok &= bool(jnp.allclose(out, exp, atol=1e-5))

    # --- Test 3: T not a multiple of 8 -> flattened lane-dense path ---
    B3, P3, T3, F3 = 3, 2, 12, 128
    x3 = jax.random.normal(k3, (B3, T3, F3), dtype=jnp.float32)
    pads3 = _make_params(k3, P3, T3, F3)
    out = jax.block_until_ready(input_prompt_forward(x3, *pads3, P3, T3, F3))
    exp = _reference(x3, *pads3, P3, T3, F3)
    ok &= bool(jnp.allclose(out, exp, atol=1e-6))

    # --- Test 4: forced small blocks -> cdiv grid with a partial trailing block ---
    B4 = 5
    x4 = jax.random.normal(k4, (B4, T, F), dtype=jnp.float32)
    out = jax.block_until_ready(
        input_prompt_forward(x4, *pads, P, T, F,
                             block_target_bytes=2 * T * F * 4))
    exp = _reference(x4, *pads, P, T, F)
    ok &= bool(jnp.allclose(out, exp, atol=1e-6))

    assert ok, "mismatch vs reference"
    print("KERNEL_OK")
</pallas_src>

<mosaic_0001>
module attributes {stable_mosaic.version = 11 : i64} {
  func.func @_add_prompt_kernel(%arg0: i32, %arg1: memref<2x16x128xf32, #tpu.memory_space<vmem>>, %arg2: memref<16x128xf32, #tpu.memory_space<vmem>>, %arg3: memref<2x16x128xf32, #tpu.memory_space<vmem>>) attributes {dimension_semantics = [#tpu.dimension_semantics<parallel>], iteration_bounds = array<i64: 1>, scalar_prefetch = 0 : i64, scratch_operands = 0 : i64, tpu.core_type = #tpu.core_type<tc>, window_params = [{transform_indices = @transform_0, window_bounds = array<i64: 2, 16, 128>}, {pipeline_mode = #tpu.pipeline_mode<synchronous>, transform_indices = @transform_1, window_bounds = array<i64: 16, 128>}, {transform_indices = @transform_2, window_bounds = array<i64: 2, 16, 128>}]} {
    %c0 = arith.constant 0 : index
    %c0_0 = arith.constant 0 : index
    %c0_1 = arith.constant 0 : index
    %0 = vector.load %arg1[%c0, %c0_0, %c0_1] : memref<2x16x128xf32, #tpu.memory_space<vmem>>, vector<2x16x128xf32>
    %c0_2 = arith.constant 0 : index
    %c0_3 = arith.constant 0 : index
    %1 = vector.load %arg2[%c0_2, %c0_3] : memref<16x128xf32, #tpu.memory_space<vmem>>, vector<16x128xf32>
    %2 = vector.shape_cast %1 : vector<16x128xf32> to vector<1x16x128xf32>
    %3 = vector.broadcast %2 : vector<1x16x128xf32> to vector<2x16x128xf32>
    %4 = arith.addf %0, %3 : vector<2x16x128xf32>
    %c0_4 = arith.constant 0 : index
    %c0_5 = arith.constant 0 : index
    %c0_6 = arith.constant 0 : index
    %5 = vector.load %arg3[%c0_4, %c0_5, %c0_6] : memref<2x16x128xf32, #tpu.memory_space<vmem>>, vector<2x16x128xf32>
    tpu.vector_store %arg3[%c0_4, %c0_5, %c0_6], %4 {strides = array<i32>} : memref<2x16x128xf32, #tpu.memory_space<vmem>>, vector<2x16x128xf32>,
    return
  }
  func.func @transform_0(%arg0: i32) -> (i32, i32, i32) {
    %c0_i32 = arith.constant 0 : i32
    %c0_i32_0 = arith.constant 0 : i32
    %c0_i32_1 = arith.constant 0 : i32
    return %arg0, %c0_i32, %c0_i32_0 : i32, i32, i32
  }
  func.func @transform_1(%arg0: i32) -> (i32, i32) {
    %c0_i32 = arith.constant 0 : i32
    %c0_i32_0 = arith.constant 0 : i32
    %c0_i32_1 = arith.constant 0 : i32
    return %c0_i32, %c0_i32_0 : i32, i32
  }
  func.func @transform_2(%arg0: i32) -> (i32, i32, i32) {
    %c0_i32 = arith.constant 0 : i32
    %c0_i32_0 = arith.constant 0 : i32
    %c0_i32_1 = arith.constant 0 : i32
    return %arg0, %c0_i32, %c0_i32_0 : i32, i32, i32
  }
}

</mosaic_0001>

<llo_original>
// kernel: tpu_custom_call.1
$region0: #{tpu_custom_call.1}
  #allocation0 [shape = 'u32[]', space=smem, size = 0x4, offset = 0x4, fixed_abs, tag = 'smem constant byte address 0x4 - core index']
  #allocation1 [shape = 'u32[144,128]{1,0:T(1,128)}', space=vmem, size = 0x12000, scoped, tag = 'internal scratch']
  %s0 = inlined_call_operand.hbm [shape: f32[2,16,128], index: 0, kind: input, shape index: {}]
  %s1 = inlined_call_operand.hbm [shape: f32[16,128], index: 1, kind: input, shape index: {}]
  %s2 = inlined_call_operand.hbm [shape: f32[2,16,128], index: 2, kind: output, shape index: {}]
  %s3 = sld [smem:[#allocation0]]
  $region26: #{tpu_custom_call.1} parent=0
    _
  %s5 = ssub.s32 1, %s3
  %s6 = scalar_select 0, %s5, %s3
  $region1: #{tpu_custom_call.1} parent=0
    #allocation2 [shape = 'u8[16384]{0}', space=vmem, size = 0x4000, scoped, tag = 'input window, operand 0, single buffered']
    #allocation3 [shape = 's32[1]{0}', space=sflag, size = 0x4, scoped, tag = 'scoped memory for tpu_custom_call.1']
    #allocation4 [shape = 's32[1]{0}', space=sflag, size = 0x4, scoped, tag = 'scoped memory for tpu_custom_call.1']
    #allocation5 [shape = 'u8[8192]{0}', space=vmem, size = 0x2000, scoped, tag = 'input window, operand 1, single buffered']
    #allocation6 [shape = 's32[1]{0}', space=sflag, size = 0x4, scoped, tag = 'scoped memory for tpu_custom_call.1']
    #allocation7 [shape = 'u8[16384]{0}', space=vmem, size = 0x4000, scoped, tag = 'output window, operand 0, single buffered']
    %7 = vsyncpa [#allocation3], 0
    %8 = vsyncpa [#allocation6], 0
    %9 = vsyncpa [#allocation4], 0
    // Predicated region
    $region2: #{tpu_custom_call.1} parent=1 // pred_check
      _
    $region3: #{tpu_custom_call.1} parent=1 // pred_check_branch
      %11 = sbr.rel (0) target = $region5
    $region4: #{tpu_custom_call.1} parent=1 // pred_region
      %s13 = ssub.s32 512, 512
      %14 = vsyncadd [#allocation3], %s13
      %s15 = sshll.u32 [#allocation2], 4
      %s16 = int_to_ptr.vmem [resolvable:$true] %s15
      %21 = dma.hbm_to_vmem [thread:$0]  %s0, 512, %s16, [#allocation3], 128, 128, 8
    $region5: #{tpu_custom_call.1} parent=1 // pred_fallthru
      _
    // Predicated region
    $region6: #{tpu_custom_call.1} parent=1 // pred_check
      _
    $region7: #{tpu_custom_call.1} parent=1 // pred_check_branch
      %23 = sbr.rel (0) target = $region9
    $region8: #{tpu_custom_call.1} parent=1 // pred_region
      %s25 = ssub.s32 256, 256
      %26 = vsyncadd [#allocation6], %s25
      %s27 = sshll.u32 [#allocation5], 4
      %s28 = int_to_ptr.vmem [resolvable:$true] %s27
      %33 = dma.hbm_to_vmem [thread:$0]  %s1, 256, %s28, [#allocation6], 128, 128, 8
    $region9: #{tpu_custom_call.1} parent=1 // pred_fallthru
      _
    // Predicated region
    $region10: #{tpu_custom_call.1} parent=1 // pred_check
      _
    $region11: #{tpu_custom_call.1} parent=1 // pred_check_branch
      %35 = sbr.rel (0) target = $region13
    $region12: #{tpu_custom_call.1} parent=1 // pred_region
      %36 = dma.done [#allocation3], 512
    $region13: #{tpu_custom_call.1} parent=1 // pred_fallthru
      _
    // Predicated region
    $region14: #{tpu_custom_call.1} parent=1 // pred_check
      _
    $region15: #{tpu_custom_call.1} parent=1 // pred_check_branch
      %38 = sbr.rel (0) target = $region17
    $region16: #{tpu_custom_call.1} parent=1 // pred_region
      %39 = dma.done [#allocation6], 256
    $region17: #{tpu_custom_call.1} parent=1 // pred_fallthru
      _
    %v40 = vld [vmem:[#allocation2] sm:$0xff]
    %v41 = vld [vmem:[#allocation2 + $0x8] sm:$0xff]
    %v42 = vld [vmem:[#allocation2 + $0x10] sm:$0xff]
    %v43 = vld [vmem:[#allocation2 + $0x18] sm:$0xff]
    %v44 = vld [vmem:[#allocation5] sm:$0xff]
    %v45 = vld [vmem:[#allocation5 + $0x8] sm:$0xff]
    %v46 = vadd.f32 %v40, %v44
    %v47 = vadd.f32 %v41, %v45
    %v48 = vadd.f32 %v42, %v44
    %v49 = vadd.f32 %v43, %v45
    %50 = vst [vmem:[#allocation7] sm:$0xff] %v46
    %51 = vst [vmem:[#allocation7 + $0x8] sm:$0xff] %v47
    %52 = vst [vmem:[#allocation7 + $0x10] sm:$0xff] %v48
    %53 = vst [vmem:[#allocation7 + $0x18] sm:$0xff] %v49
    // Predicated region
    $region18: #{tpu_custom_call.1} parent=1 // pred_check
      _
    $region19: #{tpu_custom_call.1} parent=1 // pred_check_branch
      %55 = sbr.rel (0) target = $region21
    $region20: #{tpu_custom_call.1} parent=1 // pred_region
      %s57 = ssub.s32 512, 512
      %58 = vsyncadd [#allocation4], %s57
      %s59 = sshll.u32 [#allocation7], 4
      %s60 = int_to_ptr.vmem [resolvable:$true] %s59
      %65 = dma.vmem_to_hbm [thread:$0]  %s60, 512, %s2, [#allocation4], 128, 128, 8
    $region21: #{tpu_custom_call.1} parent=1 // pred_fallthru
      _
    // Predicated region
    $region22: #{tpu_custom_call.1} parent=1 // pred_check
      _
    $region23: #{tpu_custom_call.1} parent=1 // pred_check_branch
      %67 = sbr.rel (0) target = $region25
    $region24: #{tpu_custom_call.1} parent=1 // pred_region
      %68 = dma.done [#allocation4], 512
    $region25: #{tpu_custom_call.1} parent=1 // pred_fallthru
      _
    %69 = vsyncpa [#allocation3], 1
    %70 = vsyncpa [#allocation6], 1
    %71 = vsyncpa [#allocation4], 1

</llo_original>
